<compile_context>
chip_gen: v6e
topology: v6e:2x2x1
jax: 0.10.0
libtpu: 0.0.40
codegen_flags: <defaults>
</compile_context>

<pallas_src>
import functools

import jax
import jax.numpy as jnp
from jax.experimental import pallas as pl
from jax.experimental.pallas import tpu as pltpu


def _partial_sum_8x128(sq, tb, length):
    """(tb, length) f32 -> (8, 128) partial sum using only layout-free
    sublane-group/lane-chunk slices and vector adds (VALU, no XLU)."""
    part = sq.reshape(tb // 8, 8, length).sum(axis=0)          # (8, length)
    acc = jnp.zeros((8, 128), jnp.float32)
    for j in range(length // 128):                              # lane chunks
        acc = acc + part[:, j * 128:(j + 1) * 128]
    return acc


def _mse_gaussian_kernel(pred_ref, cc_ref, out_ref, acc_ref, *,
                         inv_std, valid_rows, mask_pad):
    """One (tb, length) batch tile: build Gaussian-with-cutoff labels and
    accumulate the squared error into an (8,128) vreg-shaped accumulator."""
    r = pl.program_id(1)

    @pl.when(r == 0)
    def _init():
        acc_ref[...] = jnp.zeros_like(acc_ref)

    tb, length = pred_ref.shape

    # Position index along the lane axis (matches torch.arange().float()).
    x = jax.lax.broadcasted_iota(jnp.int32, (tb, length), 1).astype(jnp.float32)

    cc = cc_ref[...]                 # (tb, 2) f32: col 0 = center, col 1 = cutoff
    centers = cc[:, 0:1]             # (tb, 1) -> lane broadcast
    cutoffs = cc[:, 1:2]

    z = (x - centers) * inv_std
    labels = jnp.exp(-0.5 * z * z)                        # EUP
    labels = jnp.where(x < cutoffs, labels, 0.0)
    denom = jnp.sum(labels, axis=1, keepdims=True)        # (tb, 1)
    # EUP reciprocal + VPU multiply instead of a full-tile divide.
    labels = labels * pl.reciprocal(denom, approx=False)

    diff = pred_ref[...].astype(jnp.float32) - labels     # cast in-kernel (free)
    sq = diff * diff

    if mask_pad:
        base = (pl.program_id(0) * pl.num_programs(1) + r) * tb
        row = base + jax.lax.broadcasted_iota(jnp.int32, (tb, length), 0)
        sq = jnp.where(row < valid_rows, sq, 0.0)

    if length % 128 == 0:
        acc_ref[...] += _partial_sum_8x128(sq, tb, length)
    else:
        # Fallback for lane-misaligned lengths: single scalar into acc[0, 0].
        s = jnp.sum(sq)
        onehot = ((jax.lax.broadcasted_iota(jnp.int32, (8, 128), 0) == 0) &
                  (jax.lax.broadcasted_iota(jnp.int32, (8, 128), 1) == 0))
        acc_ref[...] += jnp.where(onehot, s, 0.0)

    @pl.when(r == pl.num_programs(1) - 1)
    def _finalize():
        out_ref[...] = acc_ref[...]


def _pick_tiling(batch, length, itemsize, batch_tile=None):
    """Bytes-aware tile picker: ~1 MiB of f32 work per pred block, sublane
    aligned; returns (tile_rows, num_parallel, steps, padded_batch)."""
    sub = 8 if itemsize >= 4 else (16 if itemsize == 2 else 32)
    batch_aligned = -(-batch // sub) * sub
    if batch_tile is not None:
        tb = max(sub, -(-int(batch_tile) // sub) * sub)
    else:
        target_elems = 1 << 18          # ~1 MiB f32 / 512 KiB bf16 per block
        tb = (target_elems // max(length, 1)) // sub * sub
        tb = max(sub, min(tb, 1024))
    tb = min(tb, batch_aligned)
    num_blocks = -(-batch_aligned // tb)
    num_parallel = 2 if num_blocks >= 2 else 1     # megacore split on v7x
    steps = -(-num_blocks // num_parallel)
    padded_batch = num_parallel * steps * tb
    return tb, num_parallel, steps, padded_batch


def mse_with_gaussian(pred, centers, cutoffs, *, std_dev_fraction,
                      batch_tile=None):
    """Pallas implementation of MSEwithGaussian.forward (length = pred.shape[1])."""
    batch, length = pred.shape
    itemsize = jnp.dtype(pred.dtype).itemsize
    tb, num_par, steps, padded_batch = _pick_tiling(batch, length, itemsize,
                                                    batch_tile)

    std_dev = float(length) * float(std_dev_fraction)

    centers = centers.astype(jnp.float32).reshape(batch)
    cutoffs = cutoffs.astype(jnp.float32).reshape(batch)
    pad = padded_batch - batch
    if pad:
        pred = jnp.pad(pred, ((0, pad), (0, 0)))
        # Benign Gaussian for pad rows (no NaNs); masked out inside the kernel.
        centers = jnp.pad(centers, (0, pad))
        cutoffs = jnp.pad(cutoffs, (0, pad), constant_values=float(length))
    cc = jnp.stack([centers, cutoffs], axis=1)      # (padded_batch, 2) f32

    kernel = functools.partial(
        _mse_gaussian_kernel,
        inv_std=1.0 / std_dev,
        valid_rows=batch,
        mask_pad=bool(pad),
    )

    # VMEM budget: double-buffered pred + cc blocks, scratch/out, f32 temps.
    pred_block_bytes = tb * length * itemsize
    f32_slab = tb * length * 4
    needed = (2 * pred_block_bytes + 2 * tb * 2 * 4
              + 3 * 8 * 128 * 4 + 6 * f32_slab)
    vmem_limit = int(min(max(needed, 16 << 20), 32 << 20))
    # TODO(synk): extremely long rows (length >~ 1M f32) would need an L-tiled,
    # two-pass (denominator then SSE) variant to stay within VMEM.

    partials = pl.pallas_call(
        kernel,
        out_shape=jax.ShapeDtypeStruct((num_par * 8, 128), jnp.float32),
        grid_spec=pltpu.PrefetchScalarGridSpec(
            num_scalar_prefetch=0,
            grid=(num_par, steps),
            in_specs=[
                pl.BlockSpec((tb, length), lambda p, r: (p * steps + r, 0)),
                pl.BlockSpec((tb, 2), lambda p, r: (p * steps + r, 0)),
            ],
            out_specs=pl.BlockSpec((8, 128), lambda p, r: (p, 0)),
            scratch_shapes=[pltpu.VMEM((8, 128), jnp.float32)],
        ),
        compiler_params=pltpu.CompilerParams(
            dimension_semantics=("parallel", "arbitrary"),
            vmem_limit_bytes=vmem_limit,
        ),
    )(pred, cc)

    sse = jnp.sum(partials)                       # tiny final reduce in XLA
    return sse / jnp.float32(batch * length)      # mean of F.mse_loss


def _reference(pred, centers, cutoffs, std_dev_fraction):
    """Pure-JAX reproduction of the PyTorch forward, for a sanity check."""
    batch, length = pred.shape
    x = jnp.broadcast_to(jnp.arange(length, dtype=jnp.float32), (batch, length))
    std_dev = length * std_dev_fraction
    labels = jnp.exp(-0.5 * ((x - centers[:, None]) / std_dev) ** 2)
    labels = jnp.where(x < cutoffs[:, None], labels, jnp.zeros_like(labels))
    labels = labels / jnp.sum(labels, axis=1, keepdims=True)
    return jnp.mean((pred.astype(jnp.float32) - labels) ** 2)


if __name__ == "__main__":
    STD_DEV_FRACTION = 0.1

    def run_case(b, l, key, batch_tile=None):
        k1, k2, k3 = jax.random.split(key, 3)
        pred = jax.random.uniform(k1, (b, l), dtype=jnp.float32) * 0.02
        centers = jax.random.uniform(k2, (b,), dtype=jnp.float32) * (l - 1)
        # cutoffs > 0 so each row keeps some label mass (same as PyTorch req).
        cutoffs = jax.random.uniform(k3, (b,), dtype=jnp.float32,
                                     minval=0.3 * l, maxval=float(l))
        got = jax.block_until_ready(
            mse_with_gaussian(pred, centers, cutoffs,
                              std_dev_fraction=STD_DEV_FRACTION,
                              batch_tile=batch_tile))
        want = _reference(pred, centers, cutoffs, STD_DEV_FRACTION)
        assert jnp.allclose(got, want, rtol=1e-4, atol=1e-7), (b, l, got, want)

    key = jax.random.PRNGKey(0)
    k0, k1 = jax.random.split(key)
    run_case(16, 256, k0)                    # single tile, aligned batch
    run_case(24, 256, k1, batch_tile=8)      # grid=(2,2), padded + masked rows

    print("KERNEL_OK")
</pallas_src>

<mosaic_0001>
module attributes {stable_mosaic.version = 11 : i64} {
  func.func @_mse_gaussian_kernel(%arg0: i32, %arg1: i32, %arg2: memref<16x256xf32, #tpu.memory_space<vmem>>, %arg3: memref<16x2xf32, #tpu.memory_space<vmem>>, %arg4: memref<8x128xf32, #tpu.memory_space<vmem>>, %arg5: memref<8x128xf32, #tpu.memory_space<vmem>>) attributes {dimension_semantics = [#tpu.dimension_semantics<parallel>, #tpu.dimension_semantics<arbitrary>], iteration_bounds = array<i64: 1, 1>, scalar_prefetch = 0 : i64, scratch_operands = 1 : i64, tpu.core_type = #tpu.core_type<tc>, window_params = [{transform_indices = @transform_0, window_bounds = array<i64: 16, 256>}, {transform_indices = @transform_1, window_bounds = array<i64: 16, 2>}, {transform_indices = @transform_2, window_bounds = array<i64: 8, 128>}]} {
    %c0_i32 = arith.constant 0 : i32
    %0 = arith.cmpi eq, %arg1, %c0_i32 : i32
    %1 = arith.extui %0 : i1 to i32
    %c0_i32_0 = arith.constant 0 : i32
    %2 = arith.cmpi ne, %1, %c0_i32_0 : i32
    scf.if %2 {
      %cst_15 = arith.constant 0.000000e+00 : f32
      %41 = vector.broadcast %cst_15 : f32 to vector<8x128xf32>
      %c0_16 = arith.constant 0 : index
      %c0_17 = arith.constant 0 : index
      %42 = vector.load %arg5[%c0_16, %c0_17] : memref<8x128xf32, #tpu.memory_space<vmem>>, vector<8x128xf32>
      tpu.vector_store %arg5[%c0_16, %c0_17], %41 {strides = array<i32>} : memref<8x128xf32, #tpu.memory_space<vmem>>, vector<8x128xf32>,
    } else {
    }
    %3 = tpu.iota {dimensions = array<i32: 1>} : vector<16x256xi32>
    %4 = arith.sitofp %3 : vector<16x256xi32> to vector<16x256xf32>
    %c0 = arith.constant 0 : index
    %c0_1 = arith.constant 0 : index
    %5 = vector.load %arg3[%c0, %c0_1] : memref<16x2xf32, #tpu.memory_space<vmem>>, vector<16x2xf32>
    %6 = vector.extract_strided_slice %5 {offsets = [0, 0], sizes = [16, 1], strides = [1, 1]} : vector<16x2xf32> to vector<16x1xf32>
    %7 = vector.extract_strided_slice %5 {offsets = [0, 1], sizes = [16, 1], strides = [1, 1]} : vector<16x2xf32> to vector<16x1xf32>
    %8 = vector.broadcast %6 : vector<16x1xf32> to vector<16x256xf32>
    %9 = arith.subf %4, %8 : vector<16x256xf32>
    %cst = arith.constant 3.906250e-02 : f32
    %10 = vector.broadcast %cst : f32 to vector<16x256xf32>
    %11 = arith.mulf %9, %10 : vector<16x256xf32>
    %cst_2 = arith.constant -5.000000e-01 : f32
    %12 = vector.broadcast %cst_2 : f32 to vector<16x256xf32>
    %13 = arith.mulf %12, %11 : vector<16x256xf32>
    %14 = arith.mulf %13, %11 : vector<16x256xf32>
    %15 = math.exp %14 : vector<16x256xf32>
    %16 = vector.broadcast %7 : vector<16x1xf32> to vector<16x256xf32>
    %17 = arith.cmpf olt, %4, %16 : vector<16x256xf32>
    %cst_3 = arith.constant 0.000000e+00 : f32
    %18 = vector.broadcast %cst_3 : f32 to vector<16x256xf32>
    %19 = arith.select %17, %15, %18 : vector<16x256xi1>, vector<16x256xf32>
    %cst_4 = arith.constant dense<0.000000e+00> : vector<16xf32>
    %20 = vector.multi_reduction <add>, %19, %cst_4 [1] : vector<16x256xf32> to vector<16xf32>
    %21 = vector.shape_cast %20 : vector<16xf32> to vector<16x1xf32>
    %22 = tpu.reciprocal %21 : vector<16x1xf32> -> vector<16x1xf32>
    %23 = vector.broadcast %22 : vector<16x1xf32> to vector<16x256xf32>
    %24 = arith.mulf %19, %23 : vector<16x256xf32>
    %c0_5 = arith.constant 0 : index
    %c0_6 = arith.constant 0 : index
    %25 = vector.load %arg2[%c0_5, %c0_6] : memref<16x256xf32, #tpu.memory_space<vmem>>, vector<16x256xf32>
    %26 = arith.subf %25, %24 : vector<16x256xf32>
    %27 = arith.mulf %26, %26 : vector<16x256xf32>
    %c0_7 = arith.constant 0 : index
    %c0_8 = arith.constant 0 : index
    %28 = vector.load %arg5[%c0_7, %c0_8] : memref<8x128xf32, #tpu.memory_space<vmem>>, vector<8x128xf32>
    %29 = vector.shape_cast %27 : vector<16x256xf32> to vector<2x8x256xf32>
    %cst_9 = arith.constant dense<0.000000e+00> : vector<8x256xf32>
    %30 = vector.multi_reduction <add>, %29, %cst_9 [0] : vector<2x8x256xf32> to vector<8x256xf32>
    %cst_10 = arith.constant 0.000000e+00 : f32
    %31 = vector.broadcast %cst_10 : f32 to vector<8x128xf32>
    %32 = vector.extract_strided_slice %30 {offsets = [0, 0], sizes = [8, 128], strides = [1, 1]} : vector<8x256xf32> to vector<8x128xf32>
    %33 = arith.addf %31, %32 : vector<8x128xf32>
    %34 = vector.extract_strided_slice %30 {offsets = [0, 128], sizes = [8, 128], strides = [1, 1]} : vector<8x256xf32> to vector<8x128xf32>
    %35 = arith.addf %33, %34 : vector<8x128xf32>
    %36 = arith.addf %28, %35 : vector<8x128xf32>
    %c0_11 = arith.constant 0 : index
    %c0_12 = arith.constant 0 : index
    %37 = vector.load %arg5[%c0_11, %c0_12] : memref<8x128xf32, #tpu.memory_space<vmem>>, vector<8x128xf32>
    tpu.vector_store %arg5[%c0_11, %c0_12], %36 {strides = array<i32>} : memref<8x128xf32, #tpu.memory_space<vmem>>, vector<8x128xf32>,
    %c0_i32_13 = arith.constant 0 : i32
    %38 = arith.cmpi eq, %arg1, %c0_i32_13 : i32
    %39 = arith.extui %38 : i1 to i32
    %c0_i32_14 = arith.constant 0 : i32
    %40 = arith.cmpi ne, %39, %c0_i32_14 : i32
    scf.if %40 {
      %c0_15 = arith.constant 0 : index
      %c0_16 = arith.constant 0 : index
      %41 = vector.load %arg5[%c0_15, %c0_16] : memref<8x128xf32, #tpu.memory_space<vmem>>, vector<8x128xf32>
      %c0_17 = arith.constant 0 : index
      %c0_18 = arith.constant 0 : index
      %42 = vector.load %arg4[%c0_17, %c0_18] : memref<8x128xf32, #tpu.memory_space<vmem>>, vector<8x128xf32>
      tpu.vector_store %arg4[%c0_17, %c0_18], %41 {strides = array<i32>} : memref<8x128xf32, #tpu.memory_space<vmem>>, vector<8x128xf32>,
    } else {
    }
    return
  }
  func.func @transform_0(%arg0: i32, %arg1: i32) -> (i32, i32) {
    %c1_i32 = arith.constant 1 : i32
    %0 = arith.muli %arg0, %c1_i32 : i32
    %1 = arith.addi %0, %arg1 : i32
    %c0_i32 = arith.constant 0 : i32
    %c0_i32_0 = arith.constant 0 : i32
    return %1, %c0_i32 : i32, i32
  }
  func.func @transform_1(%arg0: i32, %arg1: i32) -> (i32, i32) {
    %c1_i32 = arith.constant 1 : i32
    %0 = arith.muli %arg0, %c1_i32 : i32
    %1 = arith.addi %0, %arg1 : i32
    %c0_i32 = arith.constant 0 : i32
    %c0_i32_0 = arith.constant 0 : i32
    return %1, %c0_i32 : i32, i32
  }
  func.func @transform_2(%arg0: i32, %arg1: i32) -> (i32, i32) {
    %c0_i32 = arith.constant 0 : i32
    %c0_i32_0 = arith.constant 0 : i32
    return %arg0, %c0_i32 : i32, i32
  }
}

</mosaic_0001>

<llo_original>
// kernel: tpu_custom_call.1
$region0: #{tpu_custom_call.1}
  #allocation0 [shape = 'u32[]', space=smem, size = 0x4, offset = 0x4, fixed_abs, tag = 'smem constant byte address 0x4 - core index']
  #allocation1 [shape = 'u32[144,128]{1,0:T(1,128)}', space=vmem, size = 0x12000, scoped, tag = 'internal scratch']
  #allocation2 [shape = 'f32[8,128]{1,0:T(8,128)}', space=vmem, size = 0x1000, scoped, tag = 'scratch operand']
  %s0 = inlined_call_operand.hbm [shape: f32[16,256], index: 0, kind: input, shape index: {}]
  %s1 = inlined_call_operand.vmem [shape: f32[16,2], index: 1, kind: input, shape index: {}]
  %s2 = inlined_call_operand.hbm [shape: f32[8,128], index: 2, kind: output, shape index: {}]
  %s3 = sld [smem:[#allocation0]]
  $region30: #{tpu_custom_call.1} parent=0
    _
  %s5 = ssub.s32 1, %s3
  %s6 = scalar_select 0, %s5, %s3
  $region1: #{tpu_custom_call.1} parent=0
    #allocation3 [shape = 'u8[16384]{0}', space=vmem, size = 0x4000, scoped, tag = 'input window, operand 0, single buffered']
    #allocation4 [shape = 's32[1]{0}', space=sflag, size = 0x4, scoped, tag = 'scoped memory for tpu_custom_call.1']
    #allocation5 [shape = 's32[1]{0}', space=sflag, size = 0x4, scoped, tag = 'scoped memory for tpu_custom_call.1']
    #allocation6 [shape = 'u8[4096]{0}', space=vmem, size = 0x1000, scoped, tag = 'output window, operand 0, single buffered']
    %7 = vsyncpa [#allocation4], 0
    %8 = vsyncpa [#allocation5], 0
    // Predicated region
    $region2: #{tpu_custom_call.1} parent=1 // pred_check
      _
    $region3: #{tpu_custom_call.1} parent=1 // pred_check_branch
      %10 = sbr.rel (0) target = $region5
    $region4: #{tpu_custom_call.1} parent=1 // pred_region
      %s11 = sadd.s32 0, 0
      %s12 = smul.u32 2, %s11
      %s14 = ssub.s32 512, 512
      %15 = vsyncadd [#allocation4], %s14
      %s16 = smul.addr %s12, 2
      %s17 = smul.addr %s16, 128
      %s18 = scalar_lea.hbm %s0, %s17
      %s19 = sshll.u32 [#allocation3], 4
      %s20 = int_to_ptr.vmem [resolvable:$true] %s19
      %25 = dma.hbm_to_vmem [thread:$0]  %s18, 512, %s20, [#allocation4], 256, 256, 16
    $region5: #{tpu_custom_call.1} parent=1 // pred_fallthru
      _
    // Predicated region
    $region6: #{tpu_custom_call.1} parent=1 // pred_check
      _
    $region7: #{tpu_custom_call.1} parent=1 // pred_check_branch
      %27 = sbr.rel (0) target = $region9
    $region8: #{tpu_custom_call.1} parent=1 // pred_region
      %s28 = sadd.s32 0, 0
      %s29 = smul.u32 2, %s28
      %p30 = scmp.lt.s32.totalorder %s29, 1
      %s31 = scalar_select %p30, %s29, 1
      %s32 = smul.addr %s31, 8
      %s33 = scalar_lea.vmem %s1, %s32
      %s34 = sadd.s32 0, 0
      %s35 = smul.u32 2, %s34
    $region9: #{tpu_custom_call.1} parent=1 // pred_fallthru
      _
    // Predicated region
    $region10: #{tpu_custom_call.1} parent=1 // pred_check
      _
    $region11: #{tpu_custom_call.1} parent=1 // pred_check_branch
      %37 = sbr.rel (0) target = $region13
    $region12: #{tpu_custom_call.1} parent=1 // pred_region
      %38 = dma.done [#allocation4], 512
    $region13: #{tpu_custom_call.1} parent=1 // pred_fallthru
      _
    %s39 = sadd.s32 0, 0
    %s40 = smul.u32 2, %s39
    %p41 = scmp.lt.s32.totalorder %s40, 1
    %s42 = scalar_select %p41, %s40, 1
    %s43 = smul.addr %s42, 8
    %s44 = scalar_lea.vmem %s1, %s43
    %s45 = sadd.s32 0, 0
    %s46 = smul.u32 2, %s45
    %s47 = sadd.s32 0, 0
    %s48 = smul.u32 2, %s47
    %p49 = scmp.lt.s32.totalorder %s48, 1
    %s50 = scalar_select %p49, %s48, 1
    %s51 = smul.addr %s50, 8
    %s52 = scalar_lea.vmem %s1, %s51
    %s53 = sadd.s32 0, 0
    %s54 = smul.u32 2, %s53
    %p55 = scmp.eq.s32.totalorder 0, 0
    // Predicated region
    $region14: #{tpu_custom_call.1} parent=1 // pred_check
      %p56 = pneg %p55
    $region15: #{tpu_custom_call.1} parent=1 // pred_check_branch
      %58 = sbr.rel (%p56) target = $region17
    $region16: #{tpu_custom_call.1} parent=1 // pred_region
      %59 = vst [vmem:[#allocation2] sm:$0xff] 0.0
    $region17: #{tpu_custom_call.1} parent=1 // pred_fallthru
      _
    %v60 = vlaneseq
    %v61 = vand.u32 %v60, 127
    %v62 = vadd.s32 %v61, 128
    %v63 = vcvt.s32.f32 %v61
    %v64 = vcvt.s32.f32 %v62
    %v65 = vld [vmem:[%s52] sm:$0xff]
    %v66 = vld [vmem:[%s52 + $0x8] sm:$0xff]
    %68 = vset.pattern.permute.xlu0 0
    %69 = vperm.xlu0 %68, %v65
    %v70 = vpop.permute.xlu0 %69
    %73 = vset.pattern.permute.xlu0 0
    %74 = vperm.xlu0 %73, %v66
    %v75 = vpop.permute.xlu0 %74
    %v77 = vsub.f32 %v63, %v70
    %v78 = vsub.f32 %v64, %v70
    %v79 = vsub.f32 %v63, %v75
    %v80 = vsub.f32 %v64, %v75
    %v81 = vmul.f32 %v77, 0.0390625
    %v82 = vmul.f32 %v78, 0.0390625
    %v83 = vmul.f32 %v79, 0.0390625
    %v84 = vmul.f32 %v80, 0.0390625
    %v85 = vmul.f32 %v81, -0.5
    %v86 = vmul.f32 %v82, -0.5
    %v87 = vmul.f32 %v83, -0.5
    %v88 = vmul.f32 %v84, -0.5
    %v89 = vmul.f32 %v85, %v81
    %v90 = vmul.f32 %v86, %v82
    %v91 = vmul.f32 %v87, %v83
    %v92 = vmul.f32 %v88, %v84
    %v93 = vmul.f32 %v89, 1.442695
    %v94 = vpow.pop %v93
    %v95 = vmul.f32 %v90, 1.442695
    %v96 = vpow.pop %v95
    %v97 = vmul.f32 %v91, 1.442695
    %v98 = vpow.pop %v97
    %v99 = vmul.f32 %v92, 1.442695
    %v100 = vpow.pop %v99
    %101 = vset.pattern.permute.xlu0 1
    %102 = vperm.xlu0 %101, %v65
    %v103 = vpop.permute.xlu0 %102
    %105 = vset.pattern.permute.xlu0 1
    %106 = vperm.xlu0 %105, %v66
    %v107 = vpop.permute.xlu0 %106
    %vm109 = vcmp.lt.f32.partialorder %v63, %v103
    %vm110 = vcmp.lt.f32.partialorder %v64, %v103
    %vm111 = vcmp.lt.f32.partialorder %v63, %v107
    %vm112 = vcmp.lt.f32.partialorder %v64, %v107
    %v113 = vsel %vm109, %v94, 0.0
    %v114 = vsel %vm110, %v96, 0.0
    %v115 = vsel %vm111, %v98, 0.0
    %v116 = vsel %vm112, %v100, 0.0
    %v117 = vadd.f32 %v113, %v114
    %118 = vadd.xlane.f32.xlu0 %v117
    %v119 = vpop.xlane.xlu0 %118
    %v120 = vadd.f32 %v115, %v116
    %121 = vadd.xlane.f32.xlu0 %v120
    %v122 = vpop.xlane.xlu0 %121
    %v123 = vrcp.pop %v119
    %v124 = vrcp.pop %v122
    %v125 = vmul.f32 %v113, %v123
    %v126 = vmul.f32 %v114, %v123
    %v127 = vmul.f32 %v115, %v124
    %v128 = vmul.f32 %v116, %v124
    %v129 = vld [vmem:[#allocation3] sm:$0xff]
    %v130 = vld [vmem:[#allocation3 + $0x8] sm:$0xff]
    %v131 = vld [vmem:[#allocation3 + $0x10] sm:$0xff]
    %v132 = vld [vmem:[#allocation3 + $0x18] sm:$0xff]
    %v133 = vsub.f32 %v129, %v125
    %v134 = vsub.f32 %v130, %v126
    %v135 = vsub.f32 %v131, %v127
    %v136 = vsub.f32 %v132, %v128
    %v137 = vmul.f32 %v133, %v133
    %v138 = vmul.f32 %v134, %v134
    %v139 = vmul.f32 %v135, %v135
    %v140 = vmul.f32 %v136, %v136
    %v141 = vld [vmem:[#allocation2] sm:$0xff]
    %v142 = vadd.f32 %v137, %v139
    %v143 = vadd.f32 %v138, %v140
    %v144 = vadd.f32 %v142, 0.0
    %v145 = vadd.f32 %v144, %v143
    %v146 = vadd.f32 %v141, %v145
    %147 = vst [vmem:[#allocation2] sm:$0xff] %v146
    // Predicated region
    $region18: #{tpu_custom_call.1} parent=1 // pred_check
      %p148 = pneg %p55
    $region19: #{tpu_custom_call.1} parent=1 // pred_check_branch
      %150 = sbr.rel (%p148) target = $region21
    $region20: #{tpu_custom_call.1} parent=1 // pred_region
      %v151 = vld [vmem:[#allocation2] sm:$0xff]
      %152 = vst [vmem:[#allocation6] sm:$0xff] %v151
    $region21: #{tpu_custom_call.1} parent=1 // pred_fallthru
      _
    // Predicated region
    $region22: #{tpu_custom_call.1} parent=1 // pred_check
      _
    $region23: #{tpu_custom_call.1} parent=1 // pred_check_branch
      %154 = sbr.rel (0) target = $region25
    $region24: #{tpu_custom_call.1} parent=1 // pred_region
      %s156 = ssub.s32 128, 128
      %157 = vsyncadd [#allocation5], %s156
      %s159 = sshll.u32 [#allocation6], 4
      %s160 = int_to_ptr.vmem [resolvable:$true] %s159
      %162 = dma.vmem_to_hbm [thread:$0]  %s160, 128, %s2, [#allocation5]
    $region25: #{tpu_custom_call.1} parent=1 // pred_fallthru
      _
    // Predicated region
    $region26: #{tpu_custom_call.1} parent=1 // pred_check
      _
    $region27: #{tpu_custom_call.1} parent=1 // pred_check_branch
      %164 = sbr.rel (0) target = $region29
    $region28: #{tpu_custom_call.1} parent=1 // pred_region
      %165 = dma.done [#allocation5], 128
    $region29: #{tpu_custom_call.1} parent=1 // pred_fallthru
      _
    %166 = vsyncpa [#allocation4], 1
    %167 = vsyncpa [#allocation5], 1

</llo_original>
